<compile_context>
chip_gen: v7x
topology: tpu7x:2x2x1
jax: 0.10.0
libtpu: 0.0.40
codegen_flags: <defaults>
</compile_context>

<pallas_src>
import functools

import jax
import jax.numpy as jnp
from jax import lax
from jax.experimental import pallas as pl
from jax.experimental.pallas import tpu as pltpu

CIN = 4     # RGB + trimap
CMID = 16   # encoder channels
COUT = 1    # alpha
MAX_TILE_ROWS = 32  # encoder-output rows per grid step (VMEM budget knob)


# ----------------------------------------------------------------------------
# Fused Pallas kernel: per (batch, row-tile), encoder conv (+BN+ReLU) and decoder
# (upsample-fused conv + sigmoid) entirely in VMEM, two MXU dots per step.
# ----------------------------------------------------------------------------
def _netg_fused_kernel(x_ref, we_ref, bnb_ref, gd_ref, db_ref, o_ref, *, th, wo):
    """Refs (per grid step):
      x_ref  : (1, 1, th+3, wo+1, 16) bf16  haloed, phase-packed (space-to-depth) input
      we_ref : (64, CMID)             bf16  encoder weights (BN scale folded), window-major
      bnb_ref: (1, CMID)              f32   folded BN bias
      gd_ref : (9*CMID, 4)            f32   decoder weights regrouped: (3x3 enc-nbhd, c) x phase
      db_ref : (1, 1)                 f32   decoder conv bias
      o_ref  : (1, 1, 4, th*wo)       f32   phase-major, lane-dense alpha output
    """
    t = pl.program_id(1)
    nt = pl.num_programs(1)

    # ---------------- Encoder: 3x3 / stride-2 conv on the MXU --------------------
    # Upcast once (DMA stayed bf16); f32 keeps all in-kernel reshapes (8,128)-friendly.
    x = x_ref[0, 0].astype(jnp.float32)                      # (th+3, wo+1, 16)
    # 4 aligned 16-channel shifted windows (di, dj) of the phase-packed input.
    wins = [x[di:di + th + 2, dj:dj + wo, :]
            for di in range(2) for dj in range(2)]
    pats = jnp.concatenate(wins, axis=-1)                    # (th+2, wo, 64)
    pats = pats.reshape((th + 2) * wo, 4 * 4 * CIN).astype(jnp.bfloat16)
    acc = jnp.dot(pats, we_ref[...],
                  preferred_element_type=jnp.float32)        # (M', CMID) f32 accum
    enc = jnp.maximum(acc + bnb_ref[...], 0.0)               # folded BN + ReLU
    enc = enc.reshape(th + 2, wo, CMID)                      # rows incl. 1-row halo each side

    # Zero the out-of-image halo rows (they ARE the decoder's zero padding); no
    # scratch memset, no sublane-shifted padded-scratch write.
    row = lax.broadcasted_iota(jnp.int32, (th + 2, 1, 1), 0)
    valid = jnp.logical_and(jnp.logical_or(row > 0, t > 0),
                            jnp.logical_or(row < th + 1, t < nt - 1))
    enc = jnp.where(valid, enc, 0.0)

    # -------- Decoder: x2 nearest-upsample fused 3x3 conv as ONE MXU dot ----------
    # Width zero-padding as a single value-level concat (rows already padded via halo).
    zc = jnp.zeros((th + 2, 1, CMID), jnp.float32)
    enc_p = jnp.concatenate([zc, enc, zc], axis=1)           # (th+2, wo+2, CMID)
    # 9 distinct shifted slabs, each read exactly once and shared by all 4 phases.
    slabs = [enc_p[x0:x0 + th, y0:y0 + wo, :]
             for x0 in range(3) for y0 in range(3)]
    pdec = jnp.concatenate(slabs, axis=-1).reshape(th * wo, 9 * CMID)
    dec = jnp.dot(pdec, gd_ref[...],
                  preferred_element_type=jnp.float32)        # (th*wo, 4)
    dec = dec + db_ref[...]

    # Lane-dense store: phases on sublanes, flattened spatial dim on lanes.
    dec_t = jnp.transpose(dec, (1, 0))                       # (4, th*wo)
    # sigmoid via EUP exp + approx reciprocal, clamped to keep alpha in [0, 1]
    alpha = pl.reciprocal(1.0 + jnp.exp(-dec_t), approx=True)
    o_ref[0, 0] = jnp.minimum(alpha, 1.0).astype(o_ref.dtype)


# ----------------------------------------------------------------------------
# Plain-JAX glue: layout prep (space-to-depth + per-tile halo slabs) and weight folding.
# ----------------------------------------------------------------------------
def _pick_tile_rows(ho):
    for cand in range(min(MAX_TILE_ROWS, ho), 0, -1):
        if ho % cand == 0:
            return cand
    return ho


def _prepare_input(x_nchw, th):
    B, C, H, W = x_nchw.shape
    ho, wo = H // 2, W // 2
    nt = ho // th
    x = jnp.transpose(x_nchw, (0, 2, 3, 1))                  # NCHW -> NHWC (layout glue)
    xp = jnp.pad(x, ((0, 0), (1, 1), (1, 1), (0, 0)))        # 1-px halo (conv pad=1)
    # space-to-depth: xph[b, h', w', (2p+q)*CIN + c] = xp[b, 2h'+p, 2w'+q, c]
    phases = [xp[:, p::2, q::2, :] for p in range(2) for q in range(2)]
    xph = jnp.concatenate(phases, axis=-1)                   # (B, ho+1, wo+1, 16)
    xph_z = jnp.pad(xph, ((0, 0), (1, 1), (0, 0), (0, 0)))   # (B, ho+3, wo+1, 16)
    # per-tile haloed slabs (TH+3 rows each); stream them as bf16.
    tiles = [xph_z[:, tt * th: tt * th + th + 3] for tt in range(nt)]
    xt = jnp.stack(tiles, axis=1).astype(jnp.bfloat16)       # (B, nt, th+3, wo+1, 16)
    return xt


def _prepare_params(params):
    # Encoder: fold BN scale into the weights, regroup taps into the 4 (di,dj)
    # windows of the phase-packed input (zero rows for the unused tap/phase combos).
    we = params["w_enc"] * params["bn_scale"]                        # (3, 3, CIN, CMID)
    we_p = jnp.zeros((4, 4, CIN, CMID), jnp.float32).at[:3, :3].set(we)
    we64 = (we_p.reshape(2, 2, 2, 2, CIN, CMID)                      # (di, p, dj, q, c, o)
            .transpose(0, 2, 1, 3, 4, 5)                             # (di, dj, p, q, c, o)
            .reshape(16 * CIN, CMID).astype(jnp.bfloat16))
    bnb = params["bn_bias"].reshape(1, CMID).astype(jnp.float32)

    # Decoder: regroup the 3x3 kernel (over the x2-upsampled map) into per-output-phase
    # weights over the 3x3 neighbourhood of the zero-padded encoder activation.
    # C[r, x, i] = 1 iff tap i at output phase r reads enc_pad row offset x.
    wd = params["w_dec"][:, :, :, 0]                                 # (3, 3, CMID), COUT == 1
    Cmat = jnp.array([[[1., 0., 0.], [0., 1., 1.], [0., 0., 0.]],
                      [[0., 0., 0.], [1., 1., 0.], [0., 0., 1.]]], jnp.float32)
    gd_full = jnp.einsum('rxi,syj,ijc->xycrs', Cmat, Cmat, wd)       # (3, 3, CMID, 2, 2)
    gd = gd_full.reshape(9 * CMID, 4).astype(jnp.float32)
    db = params["dec_bias"].reshape(1, 1).astype(jnp.float32)
    return we64, bnb, gd, db


@jax.jit
def netg_forward(params, x_nchw):
    """NetG.forward: x -> encoder -> decoder. x: (B, 4, H, W) NCHW."""
    B, C, H, W = x_nchw.shape
    assert C == CIN and H % 2 == 0 and W % 2 == 0
    ho, wo = H // 2, W // 2
    assert wo % 8 == 0, "kernel assumes W/2 is a multiple of the sublane count (8)"
    th = _pick_tile_rows(ho)
    nt = ho // th

    xt = _prepare_input(x_nchw, th)
    we64, bnb, gd, db = _prepare_params(params)

    kernel = functools.partial(_netg_fused_kernel, th=th, wo=wo)
    o = pl.pallas_call(
        kernel,
        out_shape=jax.ShapeDtypeStruct((B, nt, 4, th * wo), jnp.float32),
        grid_spec=pltpu.PrefetchScalarGridSpec(
            num_scalar_prefetch=0,
            grid=(B, nt),
            in_specs=[
                pl.BlockSpec((1, 1, th + 3, wo + 1, 4 * CIN),
                             lambda b, t: (b, t, 0, 0, 0)),
                pl.BlockSpec((16 * CIN, CMID), lambda b, t: (0, 0)),
                pl.BlockSpec((1, CMID), lambda b, t: (0, 0)),
                pl.BlockSpec((9 * CMID, 4), lambda b, t: (0, 0)),
                pl.BlockSpec((1, 1), lambda b, t: (0, 0)),
            ],
            out_specs=pl.BlockSpec((1, 1, 4, th * wo),
                                   lambda b, t: (b, t, 0, 0)),
        ),
        compiler_params=pltpu.CompilerParams(
            dimension_semantics=("parallel", "parallel"),
            vmem_limit_bytes=48 * 1024 * 1024,   # tile budget sized for v7x (64 MiB phys)
        ),
    )(xt, we64, bnb, gd, db)

    # Un-interleave the phase-major output: o[b, t, 2r+s, a*wo+bc] -> out[b, 0, 2(t*th+a)+r, 2bc+s]
    o = o.reshape(B, nt, 2, 2, th, wo)          # (b, t, r, s, a, bc)
    o = jnp.transpose(o, (0, 1, 4, 2, 5, 3))    # (b, t, a, r, bc, s)
    out = o.reshape(B, H, W)[:, None, :, :]     # (B, 1, H, W)
    return out


# ----------------------------------------------------------------------------
# Parameters (PyTorch-equivalent layouts) and a plain-JAX reference for checking.
# ----------------------------------------------------------------------------
def init_params(key, cin=CIN, cmid=CMID, cout=COUT):
    k1, k2 = jax.random.split(key)
    # Conv weights in HWIO layout (PyTorch (Cout,Cin,kh,kw) -> (kh,kw,Cin,Cout)).
    w_enc = jax.random.normal(k1, (3, 3, cin, cmid), jnp.float32) * 0.1
    w_dec = jax.random.normal(k2, (3, 3, cmid, cout), jnp.float32) * 0.1
    # BatchNorm (inference / folded): gamma=1, beta=0, running_mean=0, running_var=1.
    eps = 1e-5
    gamma = jnp.ones((cmid,), jnp.float32)
    beta = jnp.zeros((cmid,), jnp.float32)
    run_mean = jnp.zeros((cmid,), jnp.float32)
    run_var = jnp.ones((cmid,), jnp.float32)
    bn_scale = gamma / jnp.sqrt(run_var + eps)
    bn_bias = beta - run_mean * bn_scale
    dec_bias = jnp.zeros((cout,), jnp.float32)
    return dict(w_enc=w_enc, bn_scale=bn_scale, bn_bias=bn_bias,
                w_dec=w_dec, dec_bias=dec_bias)


def netg_reference(params, x_nchw):
    """Pure-JAX reference of the same forward pass (for correctness checking)."""
    x = jnp.transpose(x_nchw, (0, 2, 3, 1))
    enc = lax.conv_general_dilated(
        x, params["w_enc"], window_strides=(2, 2), padding=((1, 1), (1, 1)),
        dimension_numbers=("NHWC", "HWIO", "NHWC"))
    enc = jnp.maximum(enc * params["bn_scale"] + params["bn_bias"], 0.0)
    up = jnp.repeat(jnp.repeat(enc, 2, axis=1), 2, axis=2)
    dec = lax.conv_general_dilated(
        up, params["w_dec"], window_strides=(1, 1), padding=((1, 1), (1, 1)),
        dimension_numbers=("NHWC", "HWIO", "NHWC"))
    dec = jax.nn.sigmoid(dec + params["dec_bias"])
    return jnp.transpose(dec, (0, 3, 1, 2))


if __name__ == "__main__":
    key = jax.random.PRNGKey(0)
    k_x, k_p = jax.random.split(key)
    x = jax.random.normal(k_x, (2, 4, 16, 16), jnp.float32)   # NCHW, RGB + trimap
    params = init_params(k_p)

    out = jax.block_until_ready(netg_forward(params, x))
    assert out.shape == (2, 1, 16, 16), out.shape
    assert bool(jnp.all(jnp.isfinite(out)))
    assert bool(jnp.all((out >= 0.0) & (out <= 1.0)))         # sigmoid / alpha range

    ref = netg_reference(params, x)
    err = float(jnp.max(jnp.abs(out - ref)))
    assert err < 5e-2, f"max abs err vs reference: {err}"     # bf16 + approx-recip drift

    print("KERNEL_OK")
</pallas_src>

<mosaic_0001>
module attributes {stable_mosaic.version = 11 : i64} {
  func.func @_netg_fused_kernel(%arg0: i32, %arg1: i32, %arg2: memref<1x1x11x9x16xbf16, #tpu.memory_space<vmem>>, %arg3: memref<64x16xbf16, #tpu.memory_space<vmem>>, %arg4: memref<1x16xf32, #tpu.memory_space<vmem>>, %arg5: memref<144x4xf32, #tpu.memory_space<vmem>>, %arg6: memref<1x1xf32, #tpu.memory_space<vmem>>, %arg7: memref<1x1x4x64xf32, #tpu.memory_space<vmem>>) attributes {dimension_semantics = [#tpu.dimension_semantics<parallel>, #tpu.dimension_semantics<parallel>], iteration_bounds = array<i64: 2, 1>, scalar_prefetch = 0 : i64, scratch_operands = 0 : i64, tpu.core_type = #tpu.core_type<tc>, window_params = [{transform_indices = @transform_0, window_bounds = array<i64: 1, 1, 11, 9, 16>}, {pipeline_mode = #tpu.pipeline_mode<synchronous>, transform_indices = @transform_1, window_bounds = array<i64: 64, 16>}, {pipeline_mode = #tpu.pipeline_mode<synchronous>, transform_indices = @transform_2, window_bounds = array<i64: 1, 16>}, {pipeline_mode = #tpu.pipeline_mode<synchronous>, transform_indices = @transform_3, window_bounds = array<i64: 144, 4>}, {pipeline_mode = #tpu.pipeline_mode<synchronous>, transform_indices = @transform_4, window_bounds = array<i64: 1, 1>}, {transform_indices = @transform_5, window_bounds = array<i64: 1, 1, 4, 64>}]} {
    %c0 = arith.constant 0 : index
    %c0_0 = arith.constant 0 : index
    %c0_1 = arith.constant 0 : index
    %c0_2 = arith.constant 0 : index
    %c0_3 = arith.constant 0 : index
    %0 = vector.load %arg2[%c0, %c0_0, %c0_1, %c0_2, %c0_3] : memref<1x1x11x9x16xbf16, #tpu.memory_space<vmem>>, vector<1x1x11x9x16xbf16>
    %1 = vector.shape_cast %0 : vector<1x1x11x9x16xbf16> to vector<11x9x16xbf16>
    %2 = arith.extf %1 : vector<11x9x16xbf16> to vector<11x9x16xf32>
    %3 = vector.extract_strided_slice %2 {offsets = [0, 0, 0], sizes = [10, 8, 16], strides = [1, 1, 1]} : vector<11x9x16xf32> to vector<10x8x16xf32>
    %4 = vector.extract_strided_slice %2 {offsets = [0, 1, 0], sizes = [10, 8, 16], strides = [1, 1, 1]} : vector<11x9x16xf32> to vector<10x8x16xf32>
    %5 = vector.extract_strided_slice %2 {offsets = [1, 0, 0], sizes = [10, 8, 16], strides = [1, 1, 1]} : vector<11x9x16xf32> to vector<10x8x16xf32>
    %6 = vector.extract_strided_slice %2 {offsets = [1, 1, 0], sizes = [10, 8, 16], strides = [1, 1, 1]} : vector<11x9x16xf32> to vector<10x8x16xf32>
    %7 = tpu.concatenate %3, %4, %5, %6 in 2 : vector<10x8x16xf32>, vector<10x8x16xf32>, vector<10x8x16xf32>, vector<10x8x16xf32> -> vector<10x8x64xf32>
    %8 = vector.shape_cast %7 : vector<10x8x64xf32> to vector<80x64xf32>
    %9 = arith.truncf %8 : vector<80x64xf32> to vector<80x64xbf16>
    %c0_4 = arith.constant 0 : index
    %c0_5 = arith.constant 0 : index
    %10 = vector.load %arg3[%c0_4, %c0_5] : memref<64x16xbf16, #tpu.memory_space<vmem>>, vector<64x16xbf16>
    %cst = arith.constant dense<0.000000e+00> : vector<80x16xf32>
    %11 = tpu.matmul %9, %10, %cst {dimension_numbers = #tpu.dot_dimension_numbers<[1], [0], [0], [1], [0, 0, 1, 1], [], []>} : vector<80x64xbf16>, vector<64x16xbf16>, vector<80x16xf32> -> vector<80x16xf32>
    %c0_6 = arith.constant 0 : index
    %c0_7 = arith.constant 0 : index
    %12 = vector.load %arg4[%c0_6, %c0_7] : memref<1x16xf32, #tpu.memory_space<vmem>>, vector<1x16xf32>
    %13 = vector.broadcast %12 : vector<1x16xf32> to vector<80x16xf32>
    %14 = arith.addf %11, %13 : vector<80x16xf32>
    %cst_8 = arith.constant 0.000000e+00 : f32
    %15 = vector.broadcast %cst_8 : f32 to vector<80x16xf32>
    %16 = arith.maximumf %14, %15 : vector<80x16xf32>
    %17 = vector.shape_cast %16 : vector<80x16xf32> to vector<10x8x16xf32>
    %18 = tpu.iota {dimensions = array<i32: 0>} : vector<10x1x1xi32>
    %c0_i32 = arith.constant 0 : i32
    %19 = vector.broadcast %c0_i32 : i32 to vector<10x1x1xi32>
    %20 = arith.cmpi sgt, %18, %19 : vector<10x1x1xi32>
    %c0_i32_9 = arith.constant 0 : i32
    %21 = arith.cmpi sgt, %arg1, %c0_i32_9 : i32
    %22 = vector.broadcast %21 : i1 to vector<10x1x1xi1>
    %23 = arith.ori %20, %22 : vector<10x1x1xi1>
    %c9_i32 = arith.constant 9 : i32
    %24 = vector.broadcast %c9_i32 : i32 to vector<10x1x1xi32>
    %25 = arith.cmpi slt, %18, %24 : vector<10x1x1xi32>
    %c0_i32_10 = arith.constant 0 : i32
    %26 = arith.cmpi slt, %arg1, %c0_i32_10 : i32
    %27 = vector.broadcast %26 : i1 to vector<10x1x1xi1>
    %28 = arith.ori %25, %27 : vector<10x1x1xi1>
    %29 = arith.andi %23, %28 : vector<10x1x1xi1>
    %cst_11 = arith.constant 0.000000e+00 : f32
    %30 = vector.shape_cast %29 : vector<10x1x1xi1> to vector<10x1x1xi1>
    %31 = vector.broadcast %30 : vector<10x1x1xi1> to vector<10x8x16xi1>
    %32 = vector.broadcast %cst_11 : f32 to vector<10x8x16xf32>
    %33 = arith.select %31, %17, %32 : vector<10x8x16xi1>, vector<10x8x16xf32>
    %cst_12 = arith.constant 0.000000e+00 : f32
    %34 = vector.broadcast %cst_12 : f32 to vector<10x1x16xf32>
    %35 = tpu.concatenate %34, %33, %34 in 1 : vector<10x1x16xf32>, vector<10x8x16xf32>, vector<10x1x16xf32> -> vector<10x10x16xf32>
    %36 = vector.extract_strided_slice %35 {offsets = [0, 0, 0], sizes = [8, 8, 16], strides = [1, 1, 1]} : vector<10x10x16xf32> to vector<8x8x16xf32>
    %37 = vector.extract_strided_slice %35 {offsets = [0, 1, 0], sizes = [8, 8, 16], strides = [1, 1, 1]} : vector<10x10x16xf32> to vector<8x8x16xf32>
    %38 = vector.extract_strided_slice %35 {offsets = [0, 2, 0], sizes = [8, 8, 16], strides = [1, 1, 1]} : vector<10x10x16xf32> to vector<8x8x16xf32>
    %39 = vector.extract_strided_slice %35 {offsets = [1, 0, 0], sizes = [8, 8, 16], strides = [1, 1, 1]} : vector<10x10x16xf32> to vector<8x8x16xf32>
    %40 = vector.extract_strided_slice %35 {offsets = [1, 1, 0], sizes = [8, 8, 16], strides = [1, 1, 1]} : vector<10x10x16xf32> to vector<8x8x16xf32>
    %41 = vector.extract_strided_slice %35 {offsets = [1, 2, 0], sizes = [8, 8, 16], strides = [1, 1, 1]} : vector<10x10x16xf32> to vector<8x8x16xf32>
    %42 = vector.extract_strided_slice %35 {offsets = [2, 0, 0], sizes = [8, 8, 16], strides = [1, 1, 1]} : vector<10x10x16xf32> to vector<8x8x16xf32>
    %43 = vector.extract_strided_slice %35 {offsets = [2, 1, 0], sizes = [8, 8, 16], strides = [1, 1, 1]} : vector<10x10x16xf32> to vector<8x8x16xf32>
    %44 = vector.extract_strided_slice %35 {offsets = [2, 2, 0], sizes = [8, 8, 16], strides = [1, 1, 1]} : vector<10x10x16xf32> to vector<8x8x16xf32>
    %45 = tpu.concatenate %36, %37, %38, %39, %40, %41, %42, %43, %44 in 2 : vector<8x8x16xf32>, vector<8x8x16xf32>, vector<8x8x16xf32>, vector<8x8x16xf32>, vector<8x8x16xf32>, vector<8x8x16xf32>, vector<8x8x16xf32>, vector<8x8x16xf32>, vector<8x8x16xf32> -> vector<8x8x144xf32>
    %46 = vector.shape_cast %45 : vector<8x8x144xf32> to vector<64x144xf32>
    %c0_13 = arith.constant 0 : index
    %c0_14 = arith.constant 0 : index
    %47 = vector.load %arg5[%c0_13, %c0_14] : memref<144x4xf32, #tpu.memory_space<vmem>>, vector<144x4xf32>
    %cst_15 = arith.constant dense<0.000000e+00> : vector<64x4xf32>
    %48 = tpu.matmul %46, %47, %cst_15 {dimension_numbers = #tpu.dot_dimension_numbers<[1], [0], [0], [1], [0, 0, 1, 1], [], []>} : vector<64x144xf32>, vector<144x4xf32>, vector<64x4xf32> -> vector<64x4xf32>
    %c0_16 = arith.constant 0 : index
    %c0_17 = arith.constant 0 : index
    %49 = vector.load %arg6[%c0_16, %c0_17] : memref<1x1xf32, #tpu.memory_space<vmem>>, vector<1x1xf32>
    %50 = vector.broadcast %49 : vector<1x1xf32> to vector<64x4xf32>
    %51 = arith.addf %48, %50 : vector<64x4xf32>
    %52 = tpu.transpose %51, [1, 0] : vector<64x4xf32> -> vector<4x64xf32>
    %cst_18 = arith.constant 0.000000e+00 : f32
    %53 = vector.broadcast %cst_18 : f32 to vector<4x64xf32>
    %54 = arith.subf %53, %52 : vector<4x64xf32>
    %55 = math.exp %54 : vector<4x64xf32>
    %cst_19 = arith.constant 1.000000e+00 : f32
    %56 = vector.broadcast %cst_19 : f32 to vector<4x64xf32>
    %57 = arith.addf %56, %55 : vector<4x64xf32>
    %58 = tpu.reciprocal %57 {approx = true} : vector<4x64xf32> -> vector<4x64xf32>
    %cst_20 = arith.constant 1.000000e+00 : f32
    %59 = vector.broadcast %cst_20 : f32 to vector<4x64xf32>
    %60 = arith.minimumf %58, %59 : vector<4x64xf32>
    %c0_21 = arith.constant 0 : index
    %c0_22 = arith.constant 0 : index
    %c0_23 = arith.constant 0 : index
    %c0_24 = arith.constant 0 : index
    %61 = vector.load %arg7[%c0_21, %c0_22, %c0_23, %c0_24] : memref<1x1x4x64xf32, #tpu.memory_space<vmem>>, vector<1x1x4x64xf32>
    %62 = vector.shape_cast %61 : vector<1x1x4x64xf32> to vector<4x64xf32>
    %63 = vector.shape_cast %60 : vector<4x64xf32> to vector<1x1x4x64xf32>
    tpu.vector_store %arg7[%c0_21, %c0_22, %c0_23, %c0_24], %63 {strides = array<i32>} : memref<1x1x4x64xf32, #tpu.memory_space<vmem>>, vector<1x1x4x64xf32>,
    return
  }
  func.func @transform_0(%arg0: i32, %arg1: i32) -> (i32, i32, i32, i32, i32) {
    %c0_i32 = arith.constant 0 : i32
    %c0_i32_0 = arith.constant 0 : i32
    %c0_i32_1 = arith.constant 0 : i32
    %c0_i32_2 = arith.constant 0 : i32
    return %arg0, %arg1, %c0_i32, %c0_i32_0, %c0_i32_1 : i32, i32, i32, i32, i32
  }
  func.func @transform_1(%arg0: i32, %arg1: i32) -> (i32, i32) {
    %c0_i32 = arith.constant 0 : i32
    %c0_i32_0 = arith.constant 0 : i32
    %c0_i32_1 = arith.constant 0 : i32
    return %c0_i32, %c0_i32_0 : i32, i32
  }
  func.func @transform_2(%arg0: i32, %arg1: i32) -> (i32, i32) {
    %c0_i32 = arith.constant 0 : i32
    %c0_i32_0 = arith.constant 0 : i32
    %c0_i32_1 = arith.constant 0 : i32
    return %c0_i32, %c0_i32_0 : i32, i32
  }
  func.func @transform_3(%arg0: i32, %arg1: i32) -> (i32, i32) {
    %c0_i32 = arith.constant 0 : i32
    %c0_i32_0 = arith.constant 0 : i32
    %c0_i32_1 = arith.constant 0 : i32
    return %c0_i32, %c0_i32_0 : i32, i32
  }
  func.func @transform_4(%arg0: i32, %arg1: i32) -> (i32, i32) {
    %c0_i32 = arith.constant 0 : i32
    %c0_i32_0 = arith.constant 0 : i32
    %c0_i32_1 = arith.constant 0 : i32
    return %c0_i32, %c0_i32_0 : i32, i32
  }
  func.func @transform_5(%arg0: i32, %arg1: i32) -> (i32, i32, i32, i32) {
    %c0_i32 = arith.constant 0 : i32
    %c0_i32_0 = arith.constant 0 : i32
    %c0_i32_1 = arith.constant 0 : i32
    return %arg0, %arg1, %c0_i32, %c0_i32_0 : i32, i32, i32, i32
  }
}

</mosaic_0001>

<llo_original>
// kernel: netg_forward.1
$region0: #{netg_forward.1}
  #allocation0 [shape = 'u32[]', space=smem, size = 0x4, offset = 0x4, fixed_abs, tag = 'smem constant byte address 0x4 - core index']
  #allocation1 [shape = 'u32[144,128]{1,0:T(1,128)}', space=vmem, size = 0x12000, scoped, tag = 'internal scratch']
  #allocation2 [shape = 'f32[1,1]{1,0:T(1,128)S(1)}', space=vmem, size = 0x200, scoped, tag = 'scoped memory for netg_forward.1']
  %s0 = inlined_call_operand.vmem [shape: bf16[2,1,11,9,16], index: 0, kind: input, shape index: {}]
  %s1 = inlined_call_operand.vmem [shape: bf16[64,16], index: 1, kind: input, shape index: {}]
  %s2 = inlined_call_operand.vmem [shape: f32[1,16], index: 2, kind: input, shape index: {}]
  %s3 = inlined_call_operand.vmem [shape: f32[144,4], index: 3, kind: input, shape index: {}]
  %s4 = inlined_call_operand.<no memory space> [shape: f32[1,1], index: 4, kind: input, shape index: {}]
  %s5 = inlined_call_operand.vmem [shape: f32[2,1,4,64], index: 5, kind: output, shape index: {}]
  %s6 = sld [smem:[#allocation0]]
  $region53: #{netg_forward.1} parent=0
    _
  %s8 = ssub.s32 1, %s6
  %s9 = scalar_select 0, %s8, %s6
  %v10 = vstv %s4
  %11 = vst [vmem:[#allocation2] sm:$0x1] %v10
  loop: start=0, step=1, limit=4
  $region2: #{netg_forward.1} parent=0 // loop_pre_header
    _
  $region3: #{netg_forward.1} parent=0 // loop_header
    %s13 = sphi 0, %s17
    %p14 = scmp.ge.s32.totalorder %s13, 4
    %s20 = sphi 0, %s32
    %s21 = sphi 0, %s28
    %s22 = sphi 0, %s20
    %s23 = sphi 0, %s21
    %s24 = sphi 0, %s22
    %s25 = sphi 0, %s23
    %s37 = sphi 0, %s39
    %s40 = sphi 0, %s37
    %s41 = sphi 0, %s40
    %s57 = sphi 0, %s41
    %s61 = sphi 0, %s61
    %s63 = sphi 0, %s61
    %s64 = sphi 0, %s63
    %s78 = sphi 0, %s64
    %s82 = sphi 0, %s82
    %s84 = sphi 0, %s82
    %s85 = sphi 0, %s84
    %s99 = sphi 0, %s85
    %s103 = sphi 0, %s103
    %s105 = sphi 0, %s103
    %s106 = sphi 0, %s105
    %s120 = sphi 0, %s106
    %s124 = sphi 0, %s124
    %s126 = sphi 0, %s124
    %s127 = sphi 0, %s126
    %s141 = sphi 0, %s127
    %s149 = sphi 0, %s151
    %s152 = sphi 0, %s149
    %s153 = sphi 0, %s152
    %s169 = sphi 0, %s153
  $region4: #{netg_forward.1} parent=0 // loop_header_branch
    %16 = sbr.rel (%p14) target = $region8
  $region5: #{netg_forward.1} parent=0 // loop_body
    %s18 = ssub.s32 %s13, 1
    %s19 = ssub.s32 %s13, 2
    %s26 = sadd.s32 1, %s21
    %p27 = scmp.ge.s32.totalorder %s26, 1
    %s28 = scalar_select %p27, 0, %s26
    %s29 = sadd.s32 1, %s20
    %s30 = scalar_select %p27, %s29, %s20
    %p31 = scmp.ge.s32.totalorder %s30, 2
    %s32 = scalar_select %p31, 0, %s30
    %s33 = ssub.s32 %s20, %s32
    %s34 = ssub.s32 %s21, %s28
    %s35 = sor.u32 %s33, %s34
    %p36 = scmp.eq.s32.totalorder %s35, 0
    %s38 = sadd.s32 %s37, 1
    %s39 = scalar_select %p36, %s37, %s38
    %p42 = pneg %p36
    %p43 = scmp.eq.s32.totalorder %s13, 1
    %p44 = por %p42, %p43
    %p45 = scmp.ne.s32.totalorder %s37, %s40
    %p46 = scmp.eq.s32.totalorder %s13, 0
    %p47 = por %p45, %p46
    %p48 = scmp.ne.s32.totalorder %s37, %s40
    %p49 = scmp.eq.s32.totalorder %s18, 1
    %p50 = por %p48, %p49
    %p51 = scmp.ne.s32.totalorder %s40, %s41
    %p52 = scmp.eq.s32.totalorder %s18, 0
    %p53 = por %p51, %p52
    %p54 = scmp.ne.s32.totalorder %s40, %s41
    %p55 = scmp.eq.s32.totalorder %s19, 1
    %p56 = por %p54, %p55
    %p58 = scmp.ne.s32.totalorder %s41, %s57
    %p59 = scmp.eq.s32.totalorder %s19, 0
    %p60 = por %p58, %p59
    %s62 = sadd.s32 %s61, 1
    %p65 = scmp.eq.s32.totalorder %s13, 1
    %p66 = scmp.ne.s32.totalorder %s61, %s63
    %p67 = scmp.eq.s32.totalorder %s13, 0
    %p68 = por %p66, %p67
    %p69 = scmp.ne.s32.totalorder %s61, %s63
    %p70 = scmp.eq.s32.totalorder %s18, 1
    %p71 = por %p69, %p70
    %p72 = scmp.ne.s32.totalorder %s63, %s64
    %p73 = scmp.eq.s32.totalorder %s18, 0
    %p74 = por %p72, %p73
    %p75 = scmp.ne.s32.totalorder %s63, %s64
    %p76 = scmp.eq.s32.totalorder %s19, 1
    %p77 = por %p75, %p76
    %p79 = scmp.ne.s32.totalorder %s64, %s78
    %p80 = scmp.eq.s32.totalorder %s19, 0
    %p81 = por %p79, %p80
    %s83 = sadd.s32 %s82, 1
    %p86 = scmp.eq.s32.totalorder %s13, 1
    %p87 = scmp.ne.s32.totalorder %s82, %s84
    %p88 = scmp.eq.s32.totalorder %s13, 0
    %p89 = por %p87, %p88
    %p90 = scmp.ne.s32.totalorder %s82, %s84
    %p91 = scmp.eq.s32.totalorder %s18, 1
    %p92 = por %p90, %p91
    %p93 = scmp.ne.s32.totalorder %s84, %s85
    %p94 = scmp.eq.s32.totalorder %s18, 0
    %p95 = por %p93, %p94
    %p96 = scmp.ne.s32.totalorder %s84, %s85
    %p97 = scmp.eq.s32.totalorder %s19, 1
    %p98 = por %p96, %p97
    %p100 = scmp.ne.s32.totalorder %s85, %s99
    %p101 = scmp.eq.s32.totalorder %s19, 0
    %p102 = por %p100, %p101
    %s104 = sadd.s32 %s103, 1
    %p107 = scmp.eq.s32.totalorder %s13, 1
    %p108 = scmp.ne.s32.totalorder %s103, %s105
    %p109 = scmp.eq.s32.totalorder %s13, 0
    %p110 = por %p108, %p109
    %p111 = scmp.ne.s32.totalorder %s103, %s105
    %p112 = scmp.eq.s32.totalorder %s18, 1
    %p113 = por %p111, %p112
    %p114 = scmp.ne.s32.totalorder %s105, %s106
    %p115 = scmp.eq.s32.totalorder %s18, 0
    %p116 = por %p114, %p115
    %p117 = scmp.ne.s32.totalorder %s105, %s106
    %p118 = scmp.eq.s32.totalorder %s19, 1
    %p119 = por %p117, %p118
    %p121 = scmp.ne.s32.totalorder %s106, %s120
    %p122 = scmp.eq.s32.totalorder %s19, 0
    %p123 = por %p121, %p122
    %s125 = sadd.s32 %s124, 1
    %p128 = scmp.eq.s32.totalorder %s13, 1
    %p129 = scmp.ne.s32.totalorder %s124, %s126
    %p130 = scmp.eq.s32.totalorder %s13, 0
    %p131 = por %p129, %p130
    %p132 = scmp.ne.s32.totalorder %s124, %s126
    %p133 = scmp.eq.s32.totalorder %s18, 1
    %p134 = por %p132, %p133
    %p135 = scmp.ne.s32.totalorder %s126, %s127
    %p136 = scmp.eq.s32.totalorder %s18, 0
    %p137 = por %p135, %p136
    %p138 = scmp.ne.s32.totalorder %s126, %s127
    %p139 = scmp.eq.s32.totalorder %s19, 1
    %p140 = por %p138, %p139
    %p142 = scmp.ne.s32.totalorder %s127, %s141
    %p143 = scmp.eq.s32.totalorder %s19, 0
    %p144 = por %p142, %p143
    %s145 = ssub.s32 %s20, %s32
    %s146 = ssub.s32 %s21, %s28
    %s147 = sor.u32 %s145, %s146
    %p148 = scmp.eq.s32.totalorder %s147, 0
    %s150 = sadd.s32 %s149, 1
    %s151 = scalar_select %p148, %s149, %s150
    %p154 = pneg %p148
    %p155 = scmp.eq.s32.totalorder %s13, 1
    %p156 = por %p154, %p155
    %p157 = scmp.ne.s32.totalorder %s149, %s152
    %p158 = scmp.eq.s32.totalorder %s13, 0
    %p159 = por %p157, %p158
    %p160 = scmp.ne.s32.totalorder %s149, %s152
    %p161 = scmp.eq.s32.totalorder %s18, 1
    %p162 = por %p160, %p161
    %p163 = scmp.ne.s32.totalorder %s152, %s153
    %p164 = scmp.eq.s32.totalorder %s18, 0
    %p165 = por %p163, %p164
    %p166 = scmp.ne.s32.totalorder %s152, %s153
    %p167 = scmp.eq.s32.totalorder %s19, 1
    %p168 = por %p166, %p167
    %p170 = scmp.ne.s32.totalorder %s153, %s169
    %p171 = scmp.eq.s32.totalorder %s19, 0
    %p172 = por %p170, %p171
    %p173 = scmp.le.s32.totalorder 1, %s13
    %p174 = scmp.lt.s32.totalorder %s13, 3
    %p175 = pnand %p173, %p174
    %p176 = pneg %p175
    // Predicated region
    $region9: #{netg_forward.1} parent=5 // pred_check
      _
    $region10: #{netg_forward.1} parent=5 // pred_check_branch
      %178 = sbr.rel (%p175) target = $region12
    $region11: #{netg_forward.1} parent=5 // pred_region
      %s179 = ssub.s32 %s13, 1
      // Predicated region
      $region13: #{netg_forward.1} parent=11 // pred_check
        %p180 = pneg %p74
      $region14: #{netg_forward.1} parent=11 // pred_check_branch
        %182 = sbr.rel (%p180) target = $region16
      $region15: #{netg_forward.1} parent=11 // pred_region
        _
      $region16: #{netg_forward.1} parent=11 // pred_fallthru
        _
      // Predicated region
      $region17: #{netg_forward.1} parent=11 // pred_check
        %p183 = pneg %p95
      $region18: #{netg_forward.1} parent=11 // pred_check_branch
        %185 = sbr.rel (%p183) target = $region20
      $region19: #{netg_forward.1} parent=11 // pred_region
        _
      $region20: #{netg_forward.1} parent=11 // pred_fallthru
        _
      // Predicated region
      $region21: #{netg_forward.1} parent=11 // pred_check
        %p186 = pneg %p116
      $region22: #{netg_forward.1} parent=11 // pred_check_branch
        %188 = sbr.rel (%p186) target = $region24
      $region23: #{netg_forward.1} parent=11 // pred_region
        _
      $region24: #{netg_forward.1} parent=11 // pred_fallthru
        _
      // Predicated region
      $region25: #{netg_forward.1} parent=11 // pred_check
        %p189 = pneg %p137
      $region26: #{netg_forward.1} parent=11 // pred_check_branch
        %191 = sbr.rel (%p189) target = $region28
      $region27: #{netg_forward.1} parent=11 // pred_region
        _
      $region28: #{netg_forward.1} parent=11 // pred_fallthru
        _
    $region12: #{netg_forward.1} parent=5 // pred_fallthru
      _
    %p192 = scmp.lt.s32.totalorder %s13, 2
    // Predicated region
    $region29: #{netg_forward.1} parent=5 // pred_check
      %p193 = pneg %p192
    $region30: #{netg_forward.1} parent=5 // pred_check_branch
      %195 = sbr.rel (%p193) target = $region32
    $region31: #{netg_forward.1} parent=5 // pred_region
      // Predicated region
      $region33: #{netg_forward.1} parent=31 // pred_check
        %p196 = pneg %p47
      $region34: #{netg_forward.1} parent=31 // pred_check_branch
        %198 = sbr.rel (%p196) target = $region36
      $region35: #{netg_forward.1} parent=31 // pred_region
        %p199 = scmp.lt.s32.totalorder %s20, 1
        %s200 = scalar_select %p199, %s20, 1
        %p201 = scmp.lt.s32.totalorder %s21, 0
        %s202 = scalar_select %p201, %s21, 0
        %s203 = smul.addr %s202, 22
        %s204 = smul.addr %s200, 22
        %s205 = sadd.s32 %s203, %s204
        %s206 = smul.addr %s205, 4
        %s207 = scalar_lea.vmem %s0, %s206
      $region36: #{netg_forward.1} parent=31 // pred_fallthru
        _
    $region32: #{netg_forward.1} parent=5 // pred_fallthru
      _
    %p208 = scmp.le.s32.totalorder 1, %s13
    %p209 = scmp.lt.s32.totalorder %s13, 3
    %p210 = pnand %p208, %p209
    %p211 = pneg %p210
    // Predicated region
    $region37: #{netg_forward.1} parent=5 // pred_check
      _
    $region38: #{netg_forward.1} parent=5 // pred_check_branch
      %213 = sbr.rel (%p210) target = $region40
    $region39: #{netg_forward.1} parent=5 // pred_region
      %s214 = ssub.s32 %s13, 1
      %p215 = scmp.lt.s32.totalorder %s22, 1
      %s216 = scalar_select %p215, %s22, 1
      %p217 = scmp.lt.s32.totalorder %s23, 0
      %s218 = scalar_select %p217, %s23, 0
      %s219 = smul.addr %s218, 22
      %s220 = smul.addr %s216, 22
      %s221 = sadd.s32 %s219, %s220
      %s222 = smul.addr %s221, 4
      %s223 = scalar_lea.vmem %s0, %s222
      %p224 = pneg %p53
      %p225 = pneg %p50
      %p226 = pneg %p74
      %p227 = pneg %p71
      %p228 = pneg %p95
      %p229 = pneg %p92
      %p230 = pneg %p116
      %p231 = pneg %p113
      %p232 = pneg %p137
      %p233 = pneg %p134
      %p234 = pneg %p165
      %p235 = pneg %p162
      %p236 = scmp.lt.s32.totalorder %s22, 1
      %s237 = scalar_select %p236, %s22, 1
      %p238 = scmp.lt.s32.totalorder %s23, 0
      %s239 = scalar_select %p238, %s23, 0
      %s240 = sadd.s32 %s239, %s237
      %s241 = smul.addr %s240, 4
      %s242 = scalar_lea.vmem %s5, %s241
      %p243 = scmp.lt.s32.totalorder %s22, 1
      %s244 = scalar_select %p243, %s22, 1
      %p245 = scmp.lt.s32.totalorder %s23, 0
      %s246 = scalar_select %p245, %s23, 0
      %s247 = smul.addr %s246, 22
      %s248 = smul.addr %s244, 22
      %s249 = sadd.s32 %s247, %s248
      %s250 = smul.addr %s249, 4
      %s251 = scalar_lea.vmem %s0, %s250
      %p252 = scmp.lt.s32.totalorder %s22, 1
      %s253 = scalar_select %p252, %s22, 1
      %p254 = scmp.lt.s32.totalorder %s23, 0
      %s255 = scalar_select %p254, %s23, 0
      %s256 = sadd.s32 %s255, %s253
      %s257 = smul.addr %s256, 4
      %s258 = scalar_lea.vmem %s5, %s257
      %v260 = vld [vmem:[%s251] sm:$0xf]
      %v261 = vld [vmem:[%s251 + $0x4] sm:$0x1]
      %v262 = vld [vmem:[%s251 + $0x8] sm:$0xf]
      %v263 = vld [vmem:[%s251 + $0xc] sm:$0x1]
      %v264 = vld [vmem:[%s251 + $0x10] sm:$0xf]
      %v265 = vld [vmem:[%s251 + $0x14] sm:$0x1]
      %v266 = vld [vmem:[%s251 + $0x18] sm:$0xf]
      %v267 = vld [vmem:[%s251 + $0x1c] sm:$0x1]
      %v268 = vld [vmem:[%s251 + $0x20] sm:$0xf]
      %v269 = vld [vmem:[%s251 + $0x24] sm:$0x1]
      %v270 = vld [vmem:[%s251 + $0x28] sm:$0xf]
      %v271 = vld [vmem:[%s251 + $0x2c] sm:$0x1]
      %v272 = vld [vmem:[%s251 + $0x30] sm:$0xf]
      %v273 = vld [vmem:[%s251 + $0x34] sm:$0x1]
      %v274 = vld [vmem:[%s251 + $0x38] sm:$0xf]
      %v275 = vld [vmem:[%s251 + $0x3c] sm:$0x1]
      %v276 = vld [vmem:[%s251 + $0x40] sm:$0xf]
      %v277 = vld [vmem:[%s251 + $0x44] sm:$0x1]
      %v278 = vld [vmem:[%s251 + $0x48] sm:$0xf]
      %v279 = vld [vmem:[%s251 + $0x4c] sm:$0x1]
      %v280 = vld [vmem:[%s251 + $0x50] sm:$0xf]
      %v281 = vld [vmem:[%s251 + $0x54] sm:$0x1]
      %v282 = vunpack.c.l.bf16 %v260
      %v283 = vunpack.c.l.bf16 %v261
      %v284 = vunpack.c.l.bf16 %v262
      %v285 = vunpack.c.l.bf16 %v263
      %v286 = vunpack.c.l.bf16 %v264
      %v287 = vunpack.c.l.bf16 %v265
      %v288 = vunpack.c.l.bf16 %v266
      %v289 = vunpack.c.l.bf16 %v267
      %v290 = vunpack.c.l.bf16 %v268
      %v291 = vunpack.c.l.bf16 %v269
      %v292 = vunpack.c.l.bf16 %v270
      %v293 = vunpack.c.l.bf16 %v271
      %v294 = vunpack.c.l.bf16 %v272
      %v295 = vunpack.c.l.bf16 %v273
      %v296 = vunpack.c.l.bf16 %v274
      %v297 = vunpack.c.l.bf16 %v275
      %v298 = vunpack.c.l.bf16 %v276
      %v299 = vunpack.c.l.bf16 %v277
      %v300 = vunpack.c.l.bf16 %v278
      %v301 = vunpack.c.l.bf16 %v279
      %v302 = vunpack.c.l.bf16 %v280
      %v303 = vunpack.c.l.bf16 %v281
      %vm324 = vcmask 1046528
      %v325 = vrot.slane %v282, 1
      %v326 = vrot.slane %v283, 1
      %v327 = vsel %vm324, %v325, %v326
      %v328 = vrot.slane %v284, 1
      %v329 = vrot.slane %v285, 1
      %v330 = vsel %vm324, %v328, %v329
      %v331 = vrot.slane %v286, 1
      %v332 = vrot.slane %v287, 1
      %v333 = vsel %vm324, %v331, %v332
      %v334 = vrot.slane %v288, 1
      %v335 = vrot.slane %v289, 1
      %v336 = vsel %vm324, %v334, %v335
      %v337 = vrot.slane %v290, 1
      %v338 = vrot.slane %v291, 1
      %v339 = vsel %vm324, %v337, %v338
      %v340 = vrot.slane %v292, 1
      %v341 = vrot.slane %v293, 1
      %v342 = vsel %vm324, %v340, %v341
      %v343 = vrot.slane %v294, 1
      %v344 = vrot.slane %v295, 1
      %v345 = vsel %vm324, %v343, %v344
      %v346 = vrot.slane %v296, 1
      %v347 = vrot.slane %v297, 1
      %v348 = vsel %vm324, %v346, %v347
      %v349 = vrot.slane %v298, 1
      %v350 = vrot.slane %v299, 1
      %v351 = vsel %vm324, %v349, %v350
      %v352 = vrot.slane %v300, 1
      %v353 = vrot.slane %v301, 1
      %v354 = vsel %vm324, %v352, %v353
      %355 = vrot.lane.b32.xlu0 %v327, 16
      %v356 = vpop.permute.xlu0 %355
      %357 = vrot.lane.b32.xlu0 %v330, 16
      %v358 = vpop.permute.xlu0 %357
      %359 = vrot.lane.b32.xlu0 %v333, 16
      %v360 = vpop.permute.xlu0 %359
      %361 = vrot.lane.b32.xlu0 %v336, 16
      %v362 = vpop.permute.xlu0 %361
      %363 = vrot.lane.b32.xlu0 %v339, 16
      %v364 = vpop.permute.xlu0 %363
      %365 = vrot.lane.b32.xlu0 %v342, 16
      %v366 = vpop.permute.xlu0 %365
      %367 = vrot.lane.b32.xlu0 %v345, 16
      %v368 = vpop.permute.xlu0 %367
      %369 = vrot.lane.b32.xlu0 %v348, 16
      %v370 = vpop.permute.xlu0 %369
      %371 = vrot.lane.b32.xlu0 %v351, 16
      %v372 = vpop.permute.xlu0 %371
      %373 = vrot.lane.b32.xlu0 %v354, 16
      %v374 = vpop.permute.xlu0 %373
      %386 = vrot.lane.b32.xlu0 %v284, 32
      %v387 = vpop.permute.xlu0 %386
      %388 = vrot.lane.b32.xlu0 %v286, 32
      %v389 = vpop.permute.xlu0 %388
      %390 = vrot.lane.b32.xlu0 %v288, 32
      %v391 = vpop.permute.xlu0 %390
      %392 = vrot.lane.b32.xlu0 %v290, 32
      %v393 = vpop.permute.xlu0 %392
      %394 = vrot.lane.b32.xlu0 %v292, 32
      %v395 = vpop.permute.xlu0 %394
      %396 = vrot.lane.b32.xlu0 %v294, 32
      %v397 = vpop.permute.xlu0 %396
      %398 = vrot.lane.b32.xlu0 %v296, 32
      %v399 = vpop.permute.xlu0 %398
      %400 = vrot.lane.b32.xlu0 %v298, 32
      %v401 = vpop.permute.xlu0 %400
      %402 = vrot.lane.b32.xlu0 %v300, 32
      %v403 = vpop.permute.xlu0 %402
      %404 = vrot.lane.b32.xlu0 %v302, 32
      %v405 = vpop.permute.xlu0 %404
      %v417 = vrot.slane %v302, 1
      %v418 = vrot.slane %v303, 1
      %v419 = vsel %vm324, %v417, %v418
      %420 = vrot.lane.b32.xlu0 %v330, 48
      %v421 = vpop.permute.xlu0 %420
      %422 = vrot.lane.b32.xlu0 %v333, 48
      %v423 = vpop.permute.xlu0 %422
      %424 = vrot.lane.b32.xlu0 %v336, 48
      %v425 = vpop.permute.xlu0 %424
      %426 = vrot.lane.b32.xlu0 %v339, 48
      %v427 = vpop.permute.xlu0 %426
      %428 = vrot.lane.b32.xlu0 %v342, 48
      %v429 = vpop.permute.xlu0 %428
      %430 = vrot.lane.b32.xlu0 %v345, 48
      %v431 = vpop.permute.xlu0 %430
      %432 = vrot.lane.b32.xlu0 %v348, 48
      %v433 = vpop.permute.xlu0 %432
      %434 = vrot.lane.b32.xlu0 %v351, 48
      %v435 = vpop.permute.xlu0 %434
      %436 = vrot.lane.b32.xlu0 %v354, 48
      %v437 = vpop.permute.xlu0 %436
      %438 = vrot.lane.b32.xlu0 %v419, 48
      %v439 = vpop.permute.xlu0 %438
      %vm450 = vcmask 130048
      %v451 = vsel %vm450, %v282, %v356
      %v452 = vsel %vm450, %v284, %v358
      %v453 = vsel %vm450, %v286, %v360
      %v454 = vsel %vm450, %v288, %v362
      %v455 = vsel %vm450, %v290, %v364
      %v456 = vsel %vm450, %v292, %v366
      %v457 = vsel %vm450, %v294, %v368
      %v458 = vsel %vm450, %v296, %v370
      %v459 = vsel %vm450, %v298, %v372
      %v460 = vsel %vm450, %v300, %v374
      %vm461 = vcmask 261120
      %v462 = vsel %vm461, %v451, %v387
      %v463 = vsel %vm461, %v452, %v389
      %v464 = vsel %vm461, %v453, %v391
      %v465 = vsel %vm461, %v454, %v393
      %v466 = vsel %vm461, %v455, %v395
      %v467 = vsel %vm461, %v456, %v397
      %v468 = vsel %vm461, %v457, %v399
      %v469 = vsel %vm461, %v458, %v401
      %v470 = vsel %vm461, %v459, %v403
      %v471 = vsel %vm461, %v460, %v405
      %vm472 = vcmask 392192
      %v473 = vsel %vm472, %v462, %v421
      %v474 = vsel %vm472, %v463, %v423
      %v475 = vsel %vm472, %v464, %v425
      %v476 = vsel %vm472, %v465, %v427
      %v477 = vsel %vm472, %v466, %v429
      %v478 = vsel %vm472, %v467, %v431
      %v479 = vsel %vm472, %v468, %v433
      %v480 = vsel %vm472, %v469, %v435
      %v481 = vsel %vm472, %v470, %v437
      %v482 = vsel %vm472, %v471, %v439
      %v483 = vpack.c.bf16 %v474, %v473
      %v484 = vpack.c.bf16 %v476, %v475
      %v485 = vpack.c.bf16 %v478, %v477
      %v486 = vpack.c.bf16 %v480, %v479
      %v487 = vpack.c.bf16 %v482, %v481
      %v488 = vld [vmem:[%s1] sm:$0xf]
      %v489 = vld [vmem:[%s1 + $0x4] sm:$0xf]
      %v490 = vld [vmem:[%s1 + $0x8] sm:$0xf]
      %v491 = vld [vmem:[%s1 + $0xc] sm:$0xf]
      %v492 = vld [vmem:[%s1 + $0x10] sm:$0xf]
      %v493 = vld [vmem:[%s1 + $0x14] sm:$0xf]
      %v494 = vld [vmem:[%s1 + $0x18] sm:$0xf]
      %v495 = vld [vmem:[%s1 + $0x1c] sm:$0xf]
      %v496 = vld [vmem:[%s2] sm:$0x1]
      %v498 = vlaneseq
      %v499 = vshrl.u32 %v498, 7
      %v500 = vsub.s32 0, %v499
      %v501 = vrot.slane %v496, %v500
      %v511 = vunpack.c.l.b16 %v488
      %v512 = vunpack.c.l.b16 %v489
      %v513 = vunpack.c.l.b16 %v490
      %v514 = vunpack.c.l.b16 %v491
      %v515 = vunpack.c.l.b16 %v492
      %v516 = vunpack.c.l.b16 %v493
      %v517 = vunpack.c.l.b16 %v494
      %v518 = vunpack.c.l.b16 %v495
      %v519 = vpack.c.b16 %v512, %v511
      %v520 = vpack.c.b16 %v514, %v513
      %v521 = vpack.c.b16 %v516, %v515
      %v522 = vpack.c.b16 %v518, %v517
      %vm527 = vcmask 523264
      %v529 = vsel %vm527, %v483, 0
      %v532 = vsel %vm527, %v484, 0
      %v535 = vsel %vm527, %v485, 0
      %v538 = vsel %vm527, %v486, 0
      %v541 = vsel %vm527, %v487, 0
      %543 = vmatprep.subr.bf16.mxu0 0
      %544 = vmatpush1.bf16.msra.mxu0 %v519
      %545 = vmatprep.subr.bf16.mxu0 0
      %546 = vmatpush1.bf16.msra.mxu0 %v520
      %547 = vmatprep.subr.bf16.mxu0 0
      %548 = vmatpush1.bf16.msra.mxu0 %v521
      %549 = vmatprep.subr.bf16.mxu0 0
      %550 = vmatpush1.bf16.msra.mxu0 %v522
      %551 = vmatprep.subr.bf16.mxu0 0
      %552 = vmatpush1.bf16.msra.mxu0 0
      %553 = vmatprep.subr.bf16.mxu0 0
      %554 = vmatpush1.bf16.msra.mxu0 0
      %555 = vmatprep.subr.bf16.mxu0 0
      %556 = vmatpush1.bf16.msra.mxu0 0
      %557 = vmatprep.subr.bf16.mxu0 0
      %558 = vmatpush1.bf16.msra.mxu0 0
      %559 = vmatprep.subr.bf16.mxu0 0
      %560 = vmatpush1.bf16.msra.mxu0 0
      %561 = vmatprep.subr.bf16.mxu0 0
      %562 = vmatpush1.bf16.msra.mxu0 0
      %563 = vmatprep.subr.bf16.mxu0 0
      %564 = vmatpush1.bf16.msra.mxu0 0
      %565 = vmatprep.subr.bf16.mxu0 0
      %566 = vmatpush1.bf16.msra.mxu0 0
      %567 = vmatprep.subr.bf16.mxu0 0
      %568 = vmatpush1.bf16.msra.mxu0 0
      %569 = vmatprep.subr.bf16.mxu0 0
      %570 = vmatpush1.bf16.msra.mxu0 0
      %571 = vmatprep.subr.bf16.mxu0 0
      %572 = vmatpush1.bf16.msra.mxu0 0
      %573 = vmatprep.subr.bf16.mxu0 0
      %574 = vmatpush1.bf16.msra.mxu0 0
      %575 = vmatprep.mubr.bf16.mxu0 0
      %576 = vmatmul.mubr.bf16.gmra.mrb[0].mxu0 %v529
      %v577 = vpop.f32.mrb[0].mxu0
      %v578 = vadd.f32 %v501, %v577
      %v579 = vpop.f32.mrb[0].mxu0
      %v580 = vpop.f32.mrb[0].mxu0
      %v581 = vadd.f32 %v501, %v580
      %v582 = vpop.f32.mrb[0].mxu0
      %583 = vmatprep.mubr.bf16.mxu0 0
      %584 = vmatmul.mubr.bf16.gmra.mrb[0].mxu0 %v532
      %v585 = vpop.f32.mrb[0].mxu0
      %v586 = vadd.f32 %v501, %v585
      %v587 = vpop.f32.mrb[0].mxu0
      %v588 = vpop.f32.mrb[0].mxu0
      %v589 = vadd.f32 %v501, %v588
      %v590 = vpop.f32.mrb[0].mxu0
      %591 = vmatprep.mubr.bf16.mxu0 0
      %592 = vmatmul.mubr.bf16.gmra.mrb[0].mxu0 %v535
      %v593 = vpop.f32.mrb[0].mxu0
      %v594 = vadd.f32 %v501, %v593
      %v595 = vpop.f32.mrb[0].mxu0
      %v596 = vpop.f32.mrb[0].mxu0
      %v597 = vadd.f32 %v501, %v596
      %v598 = vpop.f32.mrb[0].mxu0
      %599 = vmatprep.mubr.bf16.mxu0 0
      %600 = vmatmul.mubr.bf16.gmra.mrb[0].mxu0 %v538
      %v601 = vpop.f32.mrb[0].mxu0
      %v602 = vadd.f32 %v501, %v601
      %v603 = vpop.f32.mrb[0].mxu0
      %v604 = vpop.f32.mrb[0].mxu0
      %v605 = vadd.f32 %v501, %v604
      %v606 = vpop.f32.mrb[0].mxu0
      %607 = vmatprep.mubr.bf16.mxu0 0
      %608 = vmatmul.mubr.bf16.gmra.mrb[0].mxu0 %v541
      %v609 = vpop.f32.mrb[0].mxu0
      %v610 = vadd.f32 %v501, %v609
      %v611 = vpop.f32.mrb[0].mxu0
      %v612 = vpop.f32.mrb[0].mxu0
      %v613 = vadd.f32 %v501, %v612
      %v614 = vpop.f32.mrb[0].mxu0
      %615 = vdwg.mxu0
      %v616 = vmax.f32 %v578, 0.0
      %v617 = vmax.f32 %v581, 0.0
      %v618 = vmax.f32 %v586, 0.0
      %v619 = vmax.f32 %v589, 0.0
      %v620 = vmax.f32 %v594, 0.0
      %v621 = vmax.f32 %v597, 0.0
      %v622 = vmax.f32 %v602, 0.0
      %v623 = vmax.f32 %v605, 0.0
      %v624 = vmax.f32 %v610, 0.0
      %v625 = vmax.f32 %v613, 0.0
      %p626 = scmp.gt.s32.totalorder %s23, 0
      %s627 = scalar_select %p626, 1, 0
      %v628 = vstv %s627
      %vm629 = vcmp.eq.s32.totalorder %v628, 1
      %p630 = scmp.lt.s32.totalorder %s23, 0
      %s631 = scalar_select %p630, 1, 0
      %v632 = vstv %s631
      %vm633 = vcmp.eq.s32.totalorder %v632, 1
      %v634 = vsel %vm629, 1, 0
      %v635 = vsel %vm633, 1, 0
      %vm636 = vcmp.eq.s32.totalorder %v634, 1
      %vm637 = vcmp.eq.s32.totalorder %v635, 1
      %v638 = vsel %vm636, %v616, 0.0
      %v639 = vsel 1, %v617, 0.0
      %v640 = vsel 1, %v618, 0.0
      %v641 = vsel 1, %v619, 0.0
      %v642 = vsel 1, %v620, 0.0
      %v643 = vsel 1, %v621, 0.0
      %v644 = vsel 1, %v622, 0.0
      %v645 = vsel 1, %v623, 0.0
      %v646 = vsel 1, %v624, 0.0
      %v647 = vsel %vm637, %v625, 0.0
      %v658 = vrot.slane %v638, 7
      %v659 = vrot.slane %v639, 7
      %v660 = vrot.slane %v640, 7
      %v661 = vrot.slane %v641, 7
      %v662 = vrot.slane %v642, 7
      %v663 = vrot.slane %v643, 7
      %v664 = vrot.slane %v644, 7
      %v665 = vrot.slane %v645, 7
      %v666 = vrot.slane %v646, 7
      %v667 = vrot.slane %v647, 7
      %vm678 = vcmask 1040384
      %v679 = vsel %vm678, 0.0, %v658
      %v680 = vsel %vm678, 0.0, %v659
      %v681 = vsel %vm678, 0.0, %v660
      %v682 = vsel %vm678, 0.0, %v661
      %v683 = vsel %vm678, 0.0, %v662
      %v684 = vsel %vm678, 0.0, %v663
      %v685 = vsel %vm678, 0.0, %v664
      %v686 = vsel %vm678, 0.0, %v665
      %v687 = vsel %vm678, 0.0, %v666
      %v688 = vsel %vm678, 0.0, %v667
      %v689 = vsel %vm678, %v658, 0.0
      %v690 = vsel %vm678, %v659, 0.0
      %v691 = vsel %vm678, %v660, 0.0
      %v692 = vsel %vm678, %v661, 0.0
      %v693 = vsel %vm678, %v662, 0.0
      %v694 = vsel %vm678, %v663, 0.0
      %v695 = vsel %vm678, %v664, 0.0
      %v696 = vsel %vm678, %v665, 0.0
      %v697 = vsel %vm678, %v666, 0.0
      %v698 = vsel %vm678, %v667, 0.0
      %v715 = vrot.slane %v679, 1
      %v716 = vrot.slane %v689, 1
      %v717 = vsel %vm324, %v715, %v716
      %v718 = vrot.slane %v680, 1
      %v719 = vrot.slane %v690, 1
      %v720 = vsel %vm324, %v718, %v719
      %v721 = vrot.slane %v681, 1
      %v722 = vrot.slane %v691, 1
      %v723 = vsel %vm324, %v721, %v722
      %v724 = vrot.slane %v682, 1
      %v725 = vrot.slane %v692, 1
      %v726 = vsel %vm324, %v724, %v725
      %v727 = vrot.slane %v683, 1
      %v728 = vrot.slane %v693, 1
      %v729 = vsel %vm324, %v727, %v728
      %v730 = vrot.slane %v684, 1
      %v731 = vrot.slane %v694, 1
      %v732 = vsel %vm324, %v730, %v731
      %v733 = vrot.slane %v685, 1
      %v734 = vrot.slane %v695, 1
      %v735 = vsel %vm324, %v733, %v734
      %v736 = vrot.slane %v686, 1
      %v737 = vrot.slane %v696, 1
      %v738 = vsel %vm324, %v736, %v737
      %739 = vrot.lane.b32.xlu0 %v717, 16
      %v740 = vpop.permute.xlu0 %739
      %741 = vrot.lane.b32.xlu0 %v720, 16
      %v742 = vpop.permute.xlu0 %741
      %743 = vrot.lane.b32.xlu0 %v723, 16
      %v744 = vpop.permute.xlu0 %743
      %745 = vrot.lane.b32.xlu0 %v726, 16
      %v746 = vpop.permute.xlu0 %745
      %747 = vrot.lane.b32.xlu0 %v729, 16
      %v748 = vpop.permute.xlu0 %747
      %749 = vrot.lane.b32.xlu0 %v732, 16
      %v750 = vpop.permute.xlu0 %749
      %751 = vrot.lane.b32.xlu0 %v735, 16
      %v752 = vpop.permute.xlu0 %751
      %753 = vrot.lane.b32.xlu0 %v738, 16
      %v754 = vpop.permute.xlu0 %753
      %vm763 = vcmask 1045504
      %v764 = vrot.slane %v679, 2
      %v765 = vrot.slane %v689, 2
      %v766 = vsel %vm763, %v764, %v765
      %v767 = vrot.slane %v680, 2
      %v768 = vrot.slane %v690, 2
      %v769 = vsel %vm763, %v767, %v768
      %v770 = vrot.slane %v681, 2
      %v771 = vrot.slane %v691, 2
      %v772 = vsel %vm763, %v770, %v771
      %v773 = vrot.slane %v682, 2
      %v774 = vrot.slane %v692, 2
      %v775 = vsel %vm763, %v773, %v774
      %v776 = vrot.slane %v683, 2
      %v777 = vrot.slane %v693, 2
      %v778 = vsel %vm763, %v776, %v777
      %v779 = vrot.slane %v684, 2
      %v780 = vrot.slane %v694, 2
      %v781 = vsel %vm763, %v779, %v780
      %v782 = vrot.slane %v685, 2
      %v783 = vrot.slane %v695, 2
      %v784 = vsel %vm763, %v782, %v783
      %v785 = vrot.slane %v686, 2
      %v786 = vrot.slane %v696, 2
      %v787 = vsel %vm763, %v785, %v786
      %788 = vrot.lane.b32.xlu0 %v766, 32
      %v789 = vpop.permute.xlu0 %788
      %790 = vrot.lane.b32.xlu0 %v769, 32
      %v791 = vpop.permute.xlu0 %790
      %792 = vrot.lane.b32.xlu0 %v772, 32
      %v793 = vpop.permute.xlu0 %792
      %794 = vrot.lane.b32.xlu0 %v775, 32
      %v795 = vpop.permute.xlu0 %794
      %796 = vrot.lane.b32.xlu0 %v778, 32
      %v797 = vpop.permute.xlu0 %796
      %798 = vrot.lane.b32.xlu0 %v781, 32
      %v799 = vpop.permute.xlu0 %798
      %800 = vrot.lane.b32.xlu0 %v784, 32
      %v801 = vpop.permute.xlu0 %800
      %802 = vrot.lane.b32.xlu0 %v787, 32
      %v803 = vpop.permute.xlu0 %802
      %813 = vrot.lane.b32.xlu0 %v680, 48
      %v814 = vpop.permute.xlu0 %813
      %815 = vrot.lane.b32.xlu0 %v681, 48
      %v816 = vpop.permute.xlu0 %815
      %817 = vrot.lane.b32.xlu0 %v682, 48
      %v818 = vpop.permute.xlu0 %817
      %819 = vrot.lane.b32.xlu0 %v683, 48
      %v820 = vpop.permute.xlu0 %819
      %821 = vrot.lane.b32.xlu0 %v684, 48
      %v822 = vpop.permute.xlu0 %821
      %823 = vrot.lane.b32.xlu0 %v685, 48
      %v824 = vpop.permute.xlu0 %823
      %825 = vrot.lane.b32.xlu0 %v686, 48
      %v826 = vpop.permute.xlu0 %825
      %827 = vrot.lane.b32.xlu0 %v687, 48
      %v828 = vpop.permute.xlu0 %827
      %v838 = vrot.slane %v687, 1
      %v839 = vrot.slane %v697, 1
      %v840 = vsel %vm324, %v838, %v839
      %841 = vrot.lane.b32.xlu0 %v720, 64
      %v842 = vpop.permute.xlu0 %841
      %843 = vrot.lane.b32.xlu0 %v723, 64
      %v844 = vpop.permute.xlu0 %843
      %845 = vrot.lane.b32.xlu0 %v726, 64
      %v846 = vpop.permute.xlu0 %845
      %847 = vrot.lane.b32.xlu0 %v729, 64
      %v848 = vpop.permute.xlu0 %847
      %849 = vrot.lane.b32.xlu0 %v732, 64
      %v850 = vpop.permute.xlu0 %849
      %851 = vrot.lane.b32.xlu0 %v735, 64
      %v852 = vpop.permute.xlu0 %851
      %853 = vrot.lane.b32.xlu0 %v738, 64
      %v854 = vpop.permute.xlu0 %853
      %855 = vrot.lane.b32.xlu0 %v840, 64
      %v856 = vpop.permute.xlu0 %855
      %v865 = vrot.slane %v687, 2
      %v866 = vrot.slane %v697, 2
      %v867 = vsel %vm763, %v865, %v866
      %868 = vrot.lane.b32.xlu0 %v769, 80
      %v869 = vpop.permute.xlu0 %868
      %870 = vrot.lane.b32.xlu0 %v772, 80
      %v871 = vpop.permute.xlu0 %870
      %872 = vrot.lane.b32.xlu0 %v775, 80
      %v873 = vpop.permute.xlu0 %872
      %874 = vrot.lane.b32.xlu0 %v778, 80
      %v875 = vpop.permute.xlu0 %874
      %876 = vrot.lane.b32.xlu0 %v781, 80
      %v877 = vpop.permute.xlu0 %876
      %878 = vrot.lane.b32.xlu0 %v784, 80
      %v879 = vpop.permute.xlu0 %878
      %880 = vrot.lane.b32.xlu0 %v787, 80
      %v881 = vpop.permute.xlu0 %880
      %882 = vrot.lane.b32.xlu0 %v867, 80
      %v883 = vpop.permute.xlu0 %882
      %893 = vrot.lane.b32.xlu0 %v681, 96
      %v894 = vpop.permute.xlu0 %893
      %895 = vrot.lane.b32.xlu0 %v682, 96
      %v896 = vpop.permute.xlu0 %895
      %897 = vrot.lane.b32.xlu0 %v683, 96
      %v898 = vpop.permute.xlu0 %897
      %899 = vrot.lane.b32.xlu0 %v684, 96
      %v900 = vpop.permute.xlu0 %899
      %901 = vrot.lane.b32.xlu0 %v685, 96
      %v902 = vpop.permute.xlu0 %901
      %903 = vrot.lane.b32.xlu0 %v686, 96
      %v904 = vpop.permute.xlu0 %903
      %905 = vrot.lane.b32.xlu0 %v687, 96
      %v906 = vpop.permute.xlu0 %905
      %907 = vrot.lane.b32.xlu0 %v688, 96
      %v908 = vpop.permute.xlu0 %907
      %v918 = vrot.slane %v688, 1
      %v919 = vrot.slane %v698, 1
      %v920 = vsel %vm324, %v918, %v919
      %921 = vrot.lane.b32.xlu0 %v723, 112
      %v922 = vpop.permute.xlu0 %921
      %923 = vrot.lane.b32.xlu0 %v726, 112
      %v924 = vpop.permute.xlu0 %923
      %925 = vrot.lane.b32.xlu0 %v729, 112
      %v926 = vpop.permute.xlu0 %925
      %927 = vrot.lane.b32.xlu0 %v732, 112
      %v928 = vpop.permute.xlu0 %927
      %929 = vrot.lane.b32.xlu0 %v735, 112
      %v930 = vpop.permute.xlu0 %929
      %931 = vrot.lane.b32.xlu0 %v738, 112
      %v932 = vpop.permute.xlu0 %931
      %933 = vrot.lane.b32.xlu0 %v840, 112
      %v934 = vpop.permute.xlu0 %933
      %935 = vrot.lane.b32.xlu0 %v920, 112
      %v936 = vpop.permute.xlu0 %935
      %v945 = vrot.slane %v688, 2
      %v946 = vrot.slane %v698, 2
      %v947 = vsel %vm763, %v945, %v946
      %v948 = vsel %vm450, %v679, %v740
      %v949 = vsel %vm450, %v680, %v742
      %v950 = vsel %vm450, %v681, %v744
      %v951 = vsel %vm450, %v682, %v746
      %v952 = vsel %vm450, %v683, %v748
      %v953 = vsel %vm450, %v684, %v750
      %v954 = vsel %vm450, %v685, %v752
      %v955 = vsel %vm450, %v686, %v754
      %v956 = vsel %vm461, %v948, %v789
      %v957 = vsel %vm461, %v949, %v791
      %v958 = vsel %vm461, %v950, %v793
      %v959 = vsel %vm461, %v951, %v795
      %v960 = vsel %vm461, %v952, %v797
      %v961 = vsel %vm461, %v953, %v799
      %v962 = vsel %vm461, %v954, %v801
      %v963 = vsel %vm461, %v955, %v803
      %v964 = vsel %vm472, %v956, %v814
      %v965 = vsel %vm472, %v957, %v816
      %v966 = vsel %vm472, %v958, %v818
      %v967 = vsel %vm472, %v959, %v820
      %v968 = vsel %vm472, %v960, %v822
      %v969 = vsel %vm472, %v961, %v824
      %v970 = vsel %vm472, %v962, %v826
      %v971 = vsel %vm472, %v963, %v828
      %v972 = vsel %vm527, %v964, %v842
      %v973 = vsel %vm527, %v965, %v844
      %v974 = vsel %vm527, %v966, %v846
      %v975 = vsel %vm527, %v967, %v848
      %v976 = vsel %vm527, %v968, %v850
      %v977 = vsel %vm527, %v969, %v852
      %v978 = vsel %vm527, %v970, %v854
      %v979 = vsel %vm527, %v971, %v856
      %vm980 = vcmask 654336
      %v981 = vsel %vm980, %v972, %v869
      %v982 = vsel %vm980, %v973, %v871
      %v983 = vsel %vm980, %v974, %v873
      %v984 = vsel %vm980, %v975, %v875
      %v985 = vsel %vm980, %v976, %v877
      %v986 = vsel %vm980, %v977, %v879
      %v987 = vsel %vm980, %v978, %v881
      %v988 = vsel %vm980, %v979, %v883
      %vm989 = vcmask 785408
      %v990 = vsel %vm989, %v981, %v894
      %v991 = vsel %vm989, %v982, %v896
      %v992 = vsel %vm989, %v983, %v898
      %v993 = vsel %vm989, %v984, %v900
      %v994 = vsel %vm989, %v985, %v902
      %v995 = vsel %vm989, %v986, %v904
      %v996 = vsel %vm989, %v987, %v906
      %v997 = vsel %vm989, %v988, %v908
      %vm998 = vcmask 916480
      %v999 = vsel %vm998, %v990, %v922
      %v1000 = vsel %vm998, %v991, %v924
      %v1001 = vsel %vm998, %v992, %v926
      %v1002 = vsel %vm998, %v993, %v928
      %v1003 = vsel %vm998, %v994, %v930
      %v1004 = vsel %vm998, %v995, %v932
      %v1005 = vsel %vm998, %v996, %v934
      %v1006 = vsel %vm998, %v997, %v936
      %v1007 = vld [vmem:[%s3] sm:$0xff]
      %v1008 = vld [vmem:[%s3 + $0x8] sm:$0xff]
      %v1009 = vld [vmem:[%s3 + $0x10] sm:$0xff]
      %v1010 = vld [vmem:[%s3 + $0x18] sm:$0xff]
      %v1011 = vld [vmem:[%s3 + $0x20] sm:$0xff]
      %v1012 = vld [vmem:[%s3 + $0x28] sm:$0xff]
      %v1013 = vld [vmem:[%s3 + $0x30] sm:$0xff]
      %v1014 = vld [vmem:[%s3 + $0x38] sm:$0xff]
      %v1015 = vld [vmem:[%s3 + $0x40] sm:$0xff]
      %v1016 = vld [vmem:[%s3 + $0x48] sm:$0xff]
      %v1017 = vld [vmem:[%s3 + $0x50] sm:$0xff]
      %v1018 = vld [vmem:[%s3 + $0x58] sm:$0xff]
      %v1019 = vld [vmem:[%s3 + $0x60] sm:$0xff]
      %v1020 = vld [vmem:[%s3 + $0x68] sm:$0xff]
      %v1021 = vld [vmem:[%s3 + $0x70] sm:$0xff]
      %v1022 = vld [vmem:[%s3 + $0x78] sm:$0xff]
      %v1023 = vld [vmem:[%s3 + $0x80] sm:$0xff]
      %v1024 = vld [vmem:[%s3 + $0x88] sm:$0xff]
      %v1025 = vld [vmem:[#allocation2] sm:$0x1]
      %v1027 = vlaneseq
      %v1028 = vshrl.u32 %v1027, 7
      %v1029 = vsub.s32 0, %v1028
      %v1030 = vrot.slane %v1025, %v1029
      %1031 = vset.pattern.permute.xlu0 0
      %1032 = vperm.xlu0 %1031, %v1030
      %v1033 = vpop.permute.xlu0 %1032
      %v1035 = vsel %vm450, %v772, 0
      %v1037 = vsel %vm450, %v775, 0
      %v1039 = vsel %vm450, %v778, 0
      %v1041 = vsel %vm450, %v781, 0
      %v1043 = vsel %vm450, %v784, 0
      %v1045 = vsel %vm450, %v787, 0
      %v1047 = vsel %vm450, %v867, 0
      %v1049 = vsel %vm450, %v947, 0
      %1051 = vmatprep.subr.mxu0 0.0
      %1052 = vmatpush1.msra.mxu0 %v1007
      %1053 = vmatprep.subr.mxu0 0.0
      %1054 = vmatpush1.msra.mxu0 %v1008
      %1055 = vmatprep.subr.mxu0 0.0
      %1056 = vmatpush1.msra.mxu0 %v1009
      %1057 = vmatprep.subr.mxu0 0.0
      %1058 = vmatpush1.msra.mxu0 %v1010
      %1059 = vmatprep.subr.mxu0 0.0
      %1060 = vmatpush1.msra.mxu0 %v1011
      %1061 = vmatprep.subr.mxu0 0.0
      %1062 = vmatpush1.msra.mxu0 %v1012
      %1063 = vmatprep.subr.mxu0 0.0
      %1064 = vmatpush1.msra.mxu0 %v1013
      %1065 = vmatprep.subr.mxu0 0.0
      %1066 = vmatpush1.msra.mxu0 %v1014
      %1067 = vmatprep.subr.mxu0 0.0
      %1068 = vmatpush1.msra.mxu0 %v1015
      %1069 = vmatprep.subr.mxu0 0.0
      %1070 = vmatpush1.msra.mxu0 %v1016
      %1071 = vmatprep.subr.mxu0 0.0
      %1072 = vmatpush1.msra.mxu0 %v1017
      %1073 = vmatprep.subr.mxu0 0.0
      %1074 = vmatpush1.msra.mxu0 %v1018
      %1075 = vmatprep.subr.mxu0 0.0
      %1076 = vmatpush1.msra.mxu0 %v1019
      %1077 = vmatprep.subr.mxu0 0.0
      %1078 = vmatpush1.msra.mxu0 %v1020
      %1079 = vmatprep.subr.mxu0 0.0
      %1080 = vmatpush1.msra.mxu0 %v1021
      %1081 = vmatprep.subr.mxu0 0.0
      %1082 = vmatpush1.msra.mxu0 %v1022
      %1083 = vmatprep.subr.mxu0 0.0
      %1084 = vmatpush1.msra.mxu0 %v1023
      %1085 = vmatprep.subr.mxu0 0.0
      %1086 = vmatpush1.msra.mxu0 %v1024
      %1087 = vmatprep.subr.mxu0 0.0
      %1088 = vmatpush1.msra.mxu0 0.0
      %1089 = vmatprep.subr.mxu0 0.0
      %1090 = vmatpush1.msra.mxu0 0.0
      %1091 = vmatprep.subr.mxu0 0.0
      %1092 = vmatpush1.msra.mxu0 0.0
      %1093 = vmatprep.subr.mxu0 0.0
      %1094 = vmatpush1.msra.mxu0 0.0
      %1095 = vmatprep.subr.mxu0 0.0
      %1096 = vmatpush1.msra.mxu0 0.0
      %1097 = vmatprep.subr.mxu0 0.0
      %1098 = vmatpush1.msra.mxu0 0.0
      %1099 = vmatprep.subr.mxu0 0.0
      %1100 = vmatpush1.msra.mxu0 0.0
      %1101 = vmatprep.subr.mxu0 0.0
      %1102 = vmatpush1.msra.mxu0 0.0
      %1103 = vmatprep.subr.mxu0 0.0
      %1104 = vmatpush1.msra.mxu0 0.0
      %1105 = vmatprep.subr.mxu0 0.0
      %1106 = vmatpush1.msra.mxu0 0.0
      %1107 = vmatprep.subr.mxu0 0.0
      %1108 = vmatpush1.msra.mxu0 0.0
      %1109 = vmatprep.subr.mxu0 0.0
      %1110 = vmatpush1.msra.mxu0 0.0
      %1111 = vmatprep.subr.mxu0 0.0
      %1112 = vmatpush1.msra.mxu0 0.0
      %1113 = vmatprep.subr.mxu0 0.0
      %1114 = vmatpush1.msra.mxu0 0.0
      %1115 = vmatprep.mubr.f32.mxu0 %v1035
      %1116 = vmatmul.mubr.f32.gmra.mrb[0].mxu0 %v999
      %v1117 = vpop.f32.mrb[0].mxu0
      %v1118 = vadd.f32 %v1033, %v1117
      %v1119 = vpop.f32.mrb[0].mxu0
      %1120 = vmatprep.mubr.f32.mxu0 %v1037
      %1121 = vmatmul.mubr.f32.gmra.mrb[0].mxu0 %v1000
      %v1122 = vpop.f32.mrb[0].mxu0
      %v1123 = vadd.f32 %v1033, %v1122
      %v1124 = vpop.f32.mrb[0].mxu0
      %1125 = vmatprep.mubr.f32.mxu0 %v1039
      %1126 = vmatmul.mubr.f32.gmra.mrb[0].mxu0 %v1001
      %v1127 = vpop.f32.mrb[0].mxu0
      %v1128 = vadd.f32 %v1033, %v1127
      %v1129 = vpop.f32.mrb[0].mxu0
      %1130 = vmatprep.mubr.f32.mxu0 %v1041
      %1131 = vmatmul.mubr.f32.gmra.mrb[0].mxu0 %v1002
      %v1132 = vpop.f32.mrb[0].mxu0
      %v1133 = vadd.f32 %v1033, %v1132
      %v1134 = vpop.f32.mrb[0].mxu0
      %1135 = vmatprep.mubr.f32.mxu0 %v1043
      %1136 = vmatmul.mubr.f32.gmra.mrb[0].mxu0 %v1003
      %v1137 = vpop.f32.mrb[0].mxu0
      %v1138 = vadd.f32 %v1033, %v1137
      %v1139 = vpop.f32.mrb[0].mxu0
      %1140 = vmatprep.mubr.f32.mxu0 %v1045
      %1141 = vmatmul.mubr.f32.gmra.mrb[0].mxu0 %v1004
      %v1142 = vpop.f32.mrb[0].mxu0
      %v1143 = vadd.f32 %v1033, %v1142
      %v1144 = vpop.f32.mrb[0].mxu0
      %1145 = vmatprep.mubr.f32.mxu0 %v1047
      %1146 = vmatmul.mubr.f32.gmra.mrb[0].mxu0 %v1005
      %v1147 = vpop.f32.mrb[0].mxu0
      %v1148 = vadd.f32 %v1033, %v1147
      %v1149 = vpop.f32.mrb[0].mxu0
      %1150 = vmatprep.mubr.f32.mxu0 %v1049
      %1151 = vmatmul.mubr.f32.gmra.mrb[0].mxu0 %v1006
      %v1152 = vpop.f32.mrb[0].mxu0
      %v1153 = vadd.f32 %v1033, %v1152
      %v1154 = vpop.f32.mrb[0].mxu0
      %1155 = vdwg.mxu0
      %1156 = vxpose.xlu0.b32.start [1/16] %v1118, 128
      %1157 = vxpose.xlu0.b32.cont [2/16] %v1123, 128
      %1158 = vxpose.xlu0.b32.cont [3/16] %v1128, 128
      %1159 = vxpose.xlu0.b32.cont [4/16] %v1133, 128
      %1160 = vxpose.xlu0.b32.cont [5/16] %v1138, 128
      %1161 = vxpose.xlu0.b32.cont [6/16] %v1143, 128
      %1162 = vxpose.xlu0.b32.cont [7/16] %v1148, 128
      %1163 = vxpose.xlu0.b32.cont [8/16] %v1153, 128
      %1164 = vxpose.xlu0.b32.cont [9/16] 0.0, 128
      %1165 = vxpose.xlu0.b32.cont [10/16] 0.0, 128
      %1166 = vxpose.xlu0.b32.cont [11/16] 0.0, 128
      %1167 = vxpose.xlu0.b32.cont [12/16] 0.0, 128
      %1168 = vxpose.xlu0.b32.cont [13/16] 0.0, 128
      %1169 = vxpose.xlu0.b32.cont [14/16] 0.0, 128
      %1170 = vxpose.xlu0.b32.cont [15/16] 0.0, 128
      %1171 = vxpose.xlu0.b32.end [16/16] 0.0, 128
      %v1172 = vpop.trf.xlu0
      %v1173 = vpop.trf.xlu0
      %v1174 = vpop.trf.xlu0
      %v1175 = vpop.trf.xlu0
      %v1176 = vpop.trf.xlu0
      %v1177 = vpop.trf.xlu0
      %v1178 = vpop.trf.xlu0
      %v1179 = vpop.trf.xlu0
      %v1180 = vpop.trf.xlu0
      %v1181 = vpop.trf.xlu0
      %v1182 = vpop.trf.xlu0
      %v1183 = vpop.trf.xlu0
      %v1184 = vpop.trf.xlu0
      %v1185 = vpop.trf.xlu0
      %v1186 = vpop.trf.xlu0
      %v1187 = vpop.trf.xlu0
      %v1188 = vsub.f32 0.0, %v1172
      %v1189 = vmul.f32 %v1188, 1.442695
      %v1190 = vpow.pop %v1189
      %v1191 = vadd.f32 %v1190, 1.0
      %v1192 = vrcp.pop %v1191
      %v1193 = vmin.f32 %v1192, 1.0
      %vm1194 = vcmask 519168
      %1195 = vst.msk [vmem:[%s258] sm:$0xf] %vm1194, %v1193
      %p1196 = scmp.lt.s32.totalorder %s22, 1
      %s1197 = scalar_select %p1196, %s22, 1
      %p1198 = scmp.lt.s32.totalorder %s23, 0
      %s1199 = scalar_select %p1198, %s23, 0
      %s1200 = sadd.s32 %s1199, %s1197
      %s1201 = smul.addr %s1200, 4
      %s1202 = scalar_lea.vmem %s5, %s1201
      // Predicated region
      $region41: #{netg_forward.1} parent=39 // pred_check
        %p1203 = pneg %p162
      $region42: #{netg_forward.1} parent=39 // pred_check_branch
        %1205 = sbr.rel (%p1203) target = $region44
      $region43: #{netg_forward.1} parent=39 // pred_region
        _
      $region44: #{netg_forward.1} parent=39 // pred_fallthru
        _
    $region40: #{netg_forward.1} parent=5 // pred_fallthru
      _
    %p1206 = scmp.le.s32.totalorder 2, %s13
    // Predicated region
    $region45: #{netg_forward.1} parent=5 // pred_check
      %p1207 = pneg %p1206
    $region46: #{netg_forward.1} parent=5 // pred_check_branch
      %1209 = sbr.rel (%p1207) target = $region48
    $region47: #{netg_forward.1} parent=5 // pred_region
      %s1210 = ssub.s32 %s13, 2
      // Predicated region
      $region49: #{netg_forward.1} parent=47 // pred_check
        %p1211 = pneg %p168
      $region50: #{netg_forward.1} parent=47 // pred_check_branch
        %1213 = sbr.rel (%p1211) target = $region52
      $region51: #{netg_forward.1} parent=47 // pred_region
        %p1214 = scmp.lt.s32.totalorder %s24, 1
        %s1215 = scalar_select %p1214, %s24, 1
        %p1216 = scmp.lt.s32.totalorder %s25, 0
        %s1217 = scalar_select %p1216, %s25, 0
        %s1218 = sadd.s32 %s1217, %s1215
        %s1219 = smul.addr %s1218, 4
        %s1220 = scalar_lea.vmem %s5, %s1219
      $region52: #{netg_forward.1} parent=47 // pred_fallthru
        _
    $region48: #{netg_forward.1} parent=5 // pred_fallthru
      _
  $region6: #{netg_forward.1} parent=0 // loop_footer
    %s17 = sadd.s32 1, %s13
  $region7: #{netg_forward.1} parent=0 // loop_footer_branch
    %12 = sbr.rel target = $region3
  $region8: #{netg_forward.1} parent=0 // loop_exit
    _

</llo_original>
